<compile_context>
chip_gen: v6e
topology: v6e:2x2x1
jax: 0.10.0
libtpu: 0.0.40
codegen_flags: <defaults>
</compile_context>

<pallas_src>
import jax
import jax.numpy as jnp
from jax.experimental import pallas as pl
from jax.experimental.pallas import tpu as pltpu


def _logreg_kernel(w_ref, b_ref, x_ref, o_ref):
    # w_ref: (2, 2) f32 in SMEM, PyTorch layout [out_features, in_features]
    # b_ref: (2,)   f32 in SMEM
    # x_ref: (2, TN) f32 in VMEM  -- feature-major, batch on the lane axis
    # o_ref: (2, TN) f32 in VMEM
    x0 = x_ref[0:1, :]                      # (1, TN)
    x1 = x_ref[1:2, :]                      # (1, TN)

    w00 = w_ref[0, 0]
    w01 = w_ref[0, 1]
    w10 = w_ref[1, 0]
    w11 = w_ref[1, 1]
    b0 = b_ref[0]
    b1 = b_ref[1]

    # y = x @ W^T + b (PyTorch nn.Linear semantics), done on the VPU.
    y0 = x0 * w00 + x1 * w01 + b0
    y1 = x0 * w10 + x1 * w11 + b1

    o_ref[0:1, :] = jax.nn.sigmoid(y0)
    o_ref[1:2, :] = jax.nn.sigmoid(y1)


def net_forward(x, weight, bias, *, block_n=2048):
    """Forward pass of Net: sigmoid(x @ weight.T + bias).

    x:      (N, 2) float32
    weight: (2, 2) float32  (out_features, in_features) -- PyTorch layout
    bias:   (2,)   float32
    Returns (N, 2) float32.
    """
    n, d_in = x.shape
    d_out, d_in_w = weight.shape
    assert d_in == 2 and d_in_w == 2 and d_out == 2, "Net is nn.Linear(2, 2)"

    x = x.astype(jnp.float32)
    weight = weight.astype(jnp.float32)
    bias = bias.astype(jnp.float32)

    # Feature-major: batch on the lane axis -> lane-dense loads/stores.
    xt = x.T                                            # (2, N)

    # Pad batch up to a lane multiple (and to a tile multiple if tiling).
    n_pad = pl.cdiv(n, 128) * 128
    if n_pad > block_n:
        n_pad = pl.cdiv(n_pad, block_n) * block_n
    if n_pad != n:
        xt = jnp.pad(xt, ((0, 0), (0, n_pad - n)))

    out_shape = jax.ShapeDtypeStruct((d_out, n_pad), jnp.float32)
    smem_spec = pl.BlockSpec(memory_space=pltpu.MemorySpace.SMEM)
    cost = pl.CostEstimate(
        flops=8 * n_pad,
        transcendentals=2 * n_pad,
        bytes_accessed=16 * n_pad + 24,
    )

    if n_pad <= block_n:
        # Single block: no grid, no pipeline bookkeeping.
        out_t = pl.pallas_call(
            _logreg_kernel,
            out_shape=out_shape,
            in_specs=[
                smem_spec,
                smem_spec,
                pl.BlockSpec(memory_space=pltpu.MemorySpace.VMEM),
            ],
            out_specs=pl.BlockSpec(memory_space=pltpu.MemorySpace.VMEM),
            cost_estimate=cost,
        )(weight, bias, xt)
    else:
        # Real batch sizes: tile the batch (lane axis), parallel across cores.
        grid = (n_pad // block_n,)
        out_t = pl.pallas_call(
            _logreg_kernel,
            out_shape=out_shape,
            grid=grid,
            in_specs=[
                smem_spec,
                smem_spec,
                pl.BlockSpec((d_in, block_n), lambda i: (0, i)),
            ],
            out_specs=pl.BlockSpec((d_out, block_n), lambda i: (0, i)),
            compiler_params=pltpu.CompilerParams(
                dimension_semantics=("parallel",)
            ),
            cost_estimate=cost,
        )(weight, bias, xt)

    # Back to PyTorch layout (N, 2), dropping padding (done in XLA, not the kernel).
    return out_t[:, :n].T


if __name__ == "__main__":
    key = jax.random.PRNGKey(0)
    kx, kw, kb = jax.random.split(key, 3)

    # Small input consistent with the module's forward: two Gaussian clusters
    # of (batch, 2) features, like the original script (scaled down).
    n_per = 8
    cluster = jnp.ones((n_per, 2), dtype=jnp.float32)
    k0, k1 = jax.random.split(kx)
    data0 = 4.0 * cluster + 2.0 * jax.random.normal(k0, (n_per, 2))
    data1 = -4.0 * cluster + 2.0 * jax.random.normal(k1, (n_per, 2))
    x = jnp.concatenate([data0, data1], axis=0).astype(jnp.float32)  # (16, 2)

    # nn.Linear(2, 2)-style params: weight (2, 2), bias (2,), U(-1/sqrt(2), 1/sqrt(2)).
    bound = 1.0 / jnp.sqrt(2.0)
    weight = jax.random.uniform(kw, (2, 2), jnp.float32, -bound, bound)
    bias = jax.random.uniform(kb, (2,), jnp.float32, -bound, bound)

    out = net_forward(x, weight, bias)
    jax.block_until_ready(out)

    # Reference check in plain JAX.
    ref = jax.nn.sigmoid(x @ weight.T + bias)
    assert out.shape == (16, 2)
    assert jnp.allclose(out, ref, atol=1e-5, rtol=1e-5)

    print("KERNEL_OK")
</pallas_src>

<mosaic_0001>
module attributes {stable_mosaic.version = 11 : i64} {
  func.func @_logreg_kernel(%arg0: memref<2x2xf32, #tpu.memory_space<smem>>, %arg1: memref<2xf32, #tpu.memory_space<smem>>, %arg2: memref<2x128xf32, #tpu.memory_space<vmem>>, %arg3: memref<2x128xf32, #tpu.memory_space<vmem>>) attributes {dimension_semantics = [], scalar_prefetch = 0 : i64, scratch_operands = 0 : i64, tpu.core_type = #tpu.core_type<tc>} {
    %c0 = arith.constant 0 : index
    %c0_0 = arith.constant 0 : index
    %0 = vector.load %arg2[%c0, %c0_0] : memref<2x128xf32, #tpu.memory_space<vmem>>, vector<1x128xf32>
    %c1 = arith.constant 1 : index
    %c0_1 = arith.constant 0 : index
    %1 = vector.load %arg2[%c1, %c0_1] : memref<2x128xf32, #tpu.memory_space<vmem>>, vector<1x128xf32>
    %c0_2 = arith.constant 0 : index
    %c0_3 = arith.constant 0 : index
    %2 = memref.load %arg0[%c0_2, %c0_3] : memref<2x2xf32, #tpu.memory_space<smem>>
    %c0_4 = arith.constant 0 : index
    %c1_5 = arith.constant 1 : index
    %3 = memref.load %arg0[%c0_4, %c1_5] : memref<2x2xf32, #tpu.memory_space<smem>>
    %c1_6 = arith.constant 1 : index
    %c0_7 = arith.constant 0 : index
    %4 = memref.load %arg0[%c1_6, %c0_7] : memref<2x2xf32, #tpu.memory_space<smem>>
    %c1_8 = arith.constant 1 : index
    %c1_9 = arith.constant 1 : index
    %5 = memref.load %arg0[%c1_8, %c1_9] : memref<2x2xf32, #tpu.memory_space<smem>>
    %c0_10 = arith.constant 0 : index
    %6 = memref.load %arg1[%c0_10] : memref<2xf32, #tpu.memory_space<smem>>
    %c1_11 = arith.constant 1 : index
    %7 = memref.load %arg1[%c1_11] : memref<2xf32, #tpu.memory_space<smem>>
    %8 = vector.broadcast %2 : f32 to vector<1x128xf32>
    %9 = arith.mulf %0, %8 : vector<1x128xf32>
    %10 = vector.broadcast %3 : f32 to vector<1x128xf32>
    %11 = arith.mulf %1, %10 : vector<1x128xf32>
    %12 = arith.addf %9, %11 : vector<1x128xf32>
    %13 = vector.broadcast %6 : f32 to vector<1x128xf32>
    %14 = arith.addf %12, %13 : vector<1x128xf32>
    %15 = vector.broadcast %4 : f32 to vector<1x128xf32>
    %16 = arith.mulf %0, %15 : vector<1x128xf32>
    %17 = vector.broadcast %5 : f32 to vector<1x128xf32>
    %18 = arith.mulf %1, %17 : vector<1x128xf32>
    %19 = arith.addf %16, %18 : vector<1x128xf32>
    %20 = vector.broadcast %7 : f32 to vector<1x128xf32>
    %21 = arith.addf %19, %20 : vector<1x128xf32>
    %22 = arith.negf %14 : vector<1x128xf32>
    %23 = math.exp %22 : vector<1x128xf32>
    %cst = arith.constant 1.000000e+00 : f32
    %24 = vector.broadcast %cst : f32 to vector<1x128xf32>
    %25 = arith.addf %24, %23 : vector<1x128xf32>
    %26 = arith.divf %24, %25 : vector<1x128xf32>
    %c0_12 = arith.constant 0 : index
    %c0_13 = arith.constant 0 : index
    %27 = vector.load %arg3[%c0_12, %c0_13] : memref<2x128xf32, #tpu.memory_space<vmem>>, vector<1x128xf32>
    tpu.vector_store %arg3[%c0_12, %c0_13], %26 {strides = array<i32>} : memref<2x128xf32, #tpu.memory_space<vmem>>, vector<1x128xf32>,
    %28 = arith.negf %21 : vector<1x128xf32>
    %29 = math.exp %28 : vector<1x128xf32>
    %cst_14 = arith.constant 1.000000e+00 : f32
    %30 = vector.broadcast %cst_14 : f32 to vector<1x128xf32>
    %31 = arith.addf %30, %29 : vector<1x128xf32>
    %32 = arith.divf %30, %31 : vector<1x128xf32>
    %c1_15 = arith.constant 1 : index
    %c0_16 = arith.constant 0 : index
    %33 = vector.load %arg3[%c1_15, %c0_16] : memref<2x128xf32, #tpu.memory_space<vmem>>, vector<1x128xf32>
    tpu.vector_store %arg3[%c1_15, %c0_16], %32 {strides = array<i32>} : memref<2x128xf32, #tpu.memory_space<vmem>>, vector<1x128xf32>,
    return
  }
}

</mosaic_0001>

<llo_original>
// kernel: tpu_custom_call.1
$region0: #{tpu_custom_call.1}
  #allocation0 [shape = 'u32[]', space=smem, size = 0x4, offset = 0x4, fixed_abs, tag = 'smem constant byte address 0x4 - core index']
  #allocation1 [shape = 'u32[144,128]{1,0:T(1,128)}', space=vmem, size = 0x12000, scoped, tag = 'internal scratch']
  %s0 = inlined_call_operand.hbm [shape: f32[2,2], index: 0, kind: input, shape index: {}]
  %s1 = inlined_call_operand.vmem [shape: f32[2], index: 1, kind: input, shape index: {}]
  %s2 = inlined_call_operand.vmem [shape: f32[2,128], index: 2, kind: input, shape index: {}]
  %s3 = inlined_call_operand.hbm [shape: f32[2,128], index: 3, kind: output, shape index: {}]
  %s4 = sld [smem:[#allocation0]]
  $region30: #{tpu_custom_call.1} parent=0
    _
  %s6 = ssub.s32 1, %s4
  %s7 = scalar_select 0, %s6, %s4
  $region1: #{tpu_custom_call.1} parent=0
    #allocation2 [shape = 'u8[1024]{0}', space=smem, size = 0x400, scoped, tag = 'input window, operand 0, single buffered']
    #allocation3 [shape = 's32[1]{0}', space=sflag, size = 0x4, scoped, tag = 'scoped memory for tpu_custom_call.1']
    #allocation4 [shape = 's32[1]{0}', space=sflag, size = 0x4, scoped, tag = 'scoped memory for tpu_custom_call.1']
    #allocation5 [shape = 's32[1]{0}', space=sflag, size = 0x4, scoped, tag = 'scoped memory for tpu_custom_call.1']
    #allocation6 [shape = 'u8[512]{0}', space=smem, size = 0x200, scoped, tag = 'input window, operand 1, single buffered']
    #allocation7 [shape = 'u8[1024]{0}', space=vmem, size = 0x400, scoped, tag = 'output window, operand 0, single buffered']
    %8 = vsyncpa [#allocation4], 0
    %9 = vsyncpa [#allocation5], 0
    %10 = vsyncpa [#allocation3], 0
    // Predicated region
    $region2: #{tpu_custom_call.1} parent=1 // pred_check
      _
    $region3: #{tpu_custom_call.1} parent=1 // pred_check_branch
      %12 = sbr.rel (0) target = $region5
    $region4: #{tpu_custom_call.1} parent=1 // pred_region
      %s14 = ssub.s32 32, 32
      %15 = vsyncadd [#allocation4], %s14
      %18 = dma.hbm_to_smem %s0, 32, [#allocation2], [#allocation4]
    $region5: #{tpu_custom_call.1} parent=1 // pred_fallthru
      _
    // Predicated region
    $region6: #{tpu_custom_call.1} parent=1 // pred_check
      _
    $region7: #{tpu_custom_call.1} parent=1 // pred_check_branch
      %20 = sbr.rel (0) target = $region9
    $region8: #{tpu_custom_call.1} parent=1 // pred_region
      %s22 = ssub.s32 16, 16
      %23 = vsyncadd [#allocation5], %s22
      %s25 = sshll.u32 %s1, 4
      %s26 = int_to_ptr.vmem [resolvable:$true] %s25
      %28 = dma.vmem_to_smem %s26, 16, [#allocation6], [#allocation5]
    $region9: #{tpu_custom_call.1} parent=1 // pred_fallthru
      _
    // Predicated region
    $region10: #{tpu_custom_call.1} parent=1 // pred_check
      _
    $region11: #{tpu_custom_call.1} parent=1 // pred_check_branch
      %30 = sbr.rel (0) target = $region13
    $region12: #{tpu_custom_call.1} parent=1 // pred_region
      _
    $region13: #{tpu_custom_call.1} parent=1 // pred_fallthru
      _
    // Predicated region
    $region14: #{tpu_custom_call.1} parent=1 // pred_check
      _
    $region15: #{tpu_custom_call.1} parent=1 // pred_check_branch
      %32 = sbr.rel (0) target = $region17
    $region16: #{tpu_custom_call.1} parent=1 // pred_region
      %33 = dma.done [#allocation4], 32
    $region17: #{tpu_custom_call.1} parent=1 // pred_fallthru
      _
    // Predicated region
    $region18: #{tpu_custom_call.1} parent=1 // pred_check
      _
    $region19: #{tpu_custom_call.1} parent=1 // pred_check_branch
      %35 = sbr.rel (0) target = $region21
    $region20: #{tpu_custom_call.1} parent=1 // pred_region
      %36 = dma.done [#allocation5], 16
    $region21: #{tpu_custom_call.1} parent=1 // pred_fallthru
      _
    %37 = sfence
    %v38 = vld [vmem:[%s2] sm:$0x1]
    %v39 = vld [vmem:[%s2 + $0x1] sm:$0x1]
    %s40 = sld [smem:[#allocation2]]
    %s41 = sld [smem:[#allocation2 + $0x1]]
    %s42 = sld [smem:[#allocation2 + $0x80]]
    %s43 = sld [smem:[#allocation2 + $0x81]]
    %s44 = sld [smem:[#allocation6]]
    %s45 = sld [smem:[#allocation6 + $0x1]]
    %v46 = vstv %s40
    %v47 = vmul.f32 %v38, %v46
    %v48 = vstv %s41
    %v49 = vmul.f32 %v39, %v48
    %v50 = vadd.f32 %v47, %v49
    %v51 = vstv %s44
    %v52 = vadd.f32 %v50, %v51
    %v53 = vstv %s42
    %v54 = vmul.f32 %v38, %v53
    %v55 = vstv %s43
    %v56 = vmul.f32 %v39, %v55
    %v57 = vadd.f32 %v54, %v56
    %v58 = vstv %s45
    %v59 = vadd.f32 %v57, %v58
    %v60 = vxor.u32 %v52, 2147483648
    %v61 = vmul.f32 %v60, 1.442695
    %v62 = vpow.pop %v61
    %v63 = vadd.f32 %v62, 1.0
    %v64 = vrcp.pop %v63
    %v65 = vmul.f32 1.0, %v64
    %66 = vst [vmem:[#allocation7] sm:$0x1] %v65
    %v67 = vxor.u32 %v59, 2147483648
    %v68 = vmul.f32 %v67, 1.442695
    %v69 = vpow.pop %v68
    %v70 = vadd.f32 %v69, 1.0
    %v71 = vrcp.pop %v70
    %v72 = vmul.f32 1.0, %v71
    %73 = vst [vmem:[#allocation7 + $0x1] sm:$0x1] %v72
    // Predicated region
    $region22: #{tpu_custom_call.1} parent=1 // pred_check
      _
    $region23: #{tpu_custom_call.1} parent=1 // pred_check_branch
      %75 = sbr.rel (0) target = $region25
    $region24: #{tpu_custom_call.1} parent=1 // pred_region
      %s77 = ssub.s32 32, 32
      %78 = vsyncadd [#allocation3], %s77
      %s80 = sshll.u32 [#allocation7], 4
      %s81 = int_to_ptr.vmem [resolvable:$true] %s80
      %83 = dma.vmem_to_hbm [thread:$0]  %s81, 32, %s3, [#allocation3]
    $region25: #{tpu_custom_call.1} parent=1 // pred_fallthru
      _
    // Predicated region
    $region26: #{tpu_custom_call.1} parent=1 // pred_check
      _
    $region27: #{tpu_custom_call.1} parent=1 // pred_check_branch
      %85 = sbr.rel (0) target = $region29
    $region28: #{tpu_custom_call.1} parent=1 // pred_region
      %86 = dma.done [#allocation3], 32
    $region29: #{tpu_custom_call.1} parent=1 // pred_fallthru
      _
    %87 = vsyncpa [#allocation3], 1
    %88 = vsyncpa [#allocation4], 1
    %89 = vsyncpa [#allocation5], 1

</llo_original>
